<compile_context>
chip_gen: v6e
topology: v6e:2x2x1
jax: 0.10.0
libtpu: 0.0.40
codegen_flags: <defaults>
</compile_context>

<pallas_src>
import jax
import jax.numpy as jnp
from jax.experimental import pallas as pl
from jax.experimental.pallas import tpu as pltpu

_LANE = 128


def _head_kernel(x_ref, wqkv_ref, bqkv_ref, o_ref):
    # x_ref:    (bb*T, D)   bfloat16   (already flattened by the wrapper)
    # wqkv_ref: (D, 3*Hp)   bfloat16   (q slice pre-scaled by 1/sqrt(H); padded cols zero)
    # bqkv_ref: (1, 3*Hp)   float32    (q slice pre-scaled; padded entries zero)
    # o_ref:    (bb, T, Hp)            (Hp is a multiple of 128 -> unmasked stores)
    bb, T, Hp = o_ref.shape

    # Fused QKV projection: one MXU matmul over all bb*T rows of this block.
    qkv = jnp.dot(x_ref[...], wqkv_ref[...], preferred_element_type=jnp.float32)
    qkv = qkv + bqkv_ref[...]                 # single fused bias add (f32)
    # f32 result, T is a multiple of 8 -> sublane-only reshape, layout no-op.
    qkv = qkv.reshape(bb, T, 3 * Hp)

    # 128-lane-aligned slices: free views, no relayout.
    q = qkv[:, :, 0 * Hp:1 * Hp].astype(jnp.bfloat16)   # already scaled by 1/sqrt(H)
    k = qkv[:, :, 1 * Hp:2 * Hp].astype(jnp.bfloat16)
    v = qkv[:, :, 2 * Hp:3 * Hp].astype(jnp.bfloat16)

    # scores = q @ k^T, batched over bb, contracting the last dims directly
    # (no explicit transpose materialized).  Padded columns are zero in both
    # q and k, so they contribute nothing to the scores.
    s = jax.lax.dot_general(
        q, k,
        dimension_numbers=(((2,), (2,)), ((0,), (0,))),
        preferred_element_type=jnp.float32)              # (bb, T, T)

    # numerically-stable softmax along the last axis; reciprocal on the EUP.
    s = s - jnp.max(s, axis=-1, keepdims=True)
    p = jnp.exp(s)
    p = p * pl.reciprocal(jnp.sum(p, axis=-1, keepdims=True), approx=True)

    # dropout: identity (eval mode)
    # TODO(synk): training-mode dropout would draw pltpu.prng_random_bits here.

    out = jax.lax.dot_general(
        p.astype(jnp.bfloat16), v,
        dimension_numbers=(((2,), (1,)), ((0,), (0,))),
        preferred_element_type=jnp.float32)              # (bb, T, Hp); pad cols = 0
    o_ref[...] = out.astype(o_ref.dtype)


def _pack_qkv_padded(wq, bq, wk, bk, wv, bv, head_size, lane=_LANE):
    """Pack Wq/Wk/Wv -> (D, 3*Hp) and biases -> (1, 3*Hp).

    Hp = H rounded up to a multiple of 128 so each projection slice starts on
    a 128-lane boundary; padded columns are zero. 1/sqrt(head_size) is folded
    into the q slice.
    """
    D, H = wq.shape
    Hp = ((H + lane - 1) // lane) * lane
    scale = 1.0 / (float(head_size) ** 0.5)

    def pad_w(w):
        return jnp.pad(w, ((0, 0), (0, Hp - H)))

    def pad_b(b):
        return jnp.pad(b, ((0, Hp - H),))

    w = jnp.concatenate([pad_w(wq * scale), pad_w(wk), pad_w(wv)], axis=1)
    b = jnp.concatenate([pad_b(bq * scale), pad_b(bk), pad_b(bv)], axis=0)
    return w, b.reshape(1, -1), Hp


def _num_tensorcores():
    # TODO(synk): switch to a stable pltpu.get_tpu_info() core-count query when
    # available; the conservative default of 1 (v5e/v6e) keeps small problems
    # on a single grid step, which is also harmless (just serial) on v7x.
    try:
        return max(1, int(getattr(jax.devices()[0], "num_cores", 1)))
    except Exception:
        return 1


def head_forward(x, wq, bq, wk, bk, wv, bv, head_size, *,
                 batch_block=None, out_dtype=None):
    """x: (B, T, D) f32; wq/wk/wv: (D, H); bq/bk/bv: (H,). Returns (B, T, H)."""
    B, T, D = x.shape
    H = wq.shape[1]
    out_dtype = x.dtype if out_dtype is None else out_dtype

    if batch_block is None:
        # Default: one grid step (single-TensorCore v5e/v6e gain nothing from
        # more steps). Split 2-way only when a second TensorCore is visible
        # AND each half-block carries enough work to hide dispatch overhead.
        batch_block = B
        if B >= 2 and B % 2 == 0:
            flops_per_half = (B // 2) * T * (2 * D * 3 * H + 4 * T * H)
            if _num_tensorcores() >= 2 and flops_per_half >= 4_000_000:
                batch_block = B // 2
    assert B % batch_block == 0, "B must be divisible by batch_block"
    bb = batch_block
    num_blocks = B // bb

    w_packed, b_packed, Hp = _pack_qkv_padded(wq, bq, wk, bk, wv, bv, head_size)

    # Flatten in HBM (metadata no-op) + cast MXU operands to bf16 in the
    # wrapper; accumulation and softmax stay f32 in-kernel.
    x_flat = x.reshape(num_blocks, bb * T, D).astype(jnp.bfloat16)
    w_bf16 = w_packed.astype(jnp.bfloat16)

    out_padded = pl.pallas_call(
        _head_kernel,
        out_shape=jax.ShapeDtypeStruct((B, T, Hp), out_dtype),
        grid_spec=pltpu.PrefetchScalarGridSpec(
            num_scalar_prefetch=0,
            grid=(num_blocks,),
            in_specs=[
                # leading block dim squeezed -> kernel sees (bb*T, D) directly
                pl.BlockSpec((None, bb * T, D), lambda i: (i, 0, 0)),
                pl.BlockSpec((D, 3 * Hp), lambda i: (0, 0)),     # packed W (resident)
                pl.BlockSpec((1, 3 * Hp), lambda i: (0, 0)),     # packed bias
            ],
            out_specs=pl.BlockSpec((bb, T, Hp), lambda i: (i, 0, 0)),
        ),
        compiler_params=pltpu.CompilerParams(
            dimension_semantics=("parallel",)),
    )(x_flat, w_bf16, b_packed)

    # Drop the zero lane padding outside the kernel (cheap XLA slice).
    return out_padded[..., :H]


def _reference_f32(x, wq, bq, wk, bk, wv, bv, head_size):
    """Pure f32 reference (exact PyTorch eval-mode semantics)."""
    q = x @ wq + bq
    k = x @ wk + bk
    v = x @ wv + bv
    wei = jnp.einsum("btd,bsd->bts", q, k) / (float(head_size) ** 0.5)
    wei = jax.nn.softmax(wei, axis=-1)
    return jnp.einsum("bts,bsd->btd", wei, v)


def _reference_matched(x, wq, bq, wk, bk, wv, bv, head_size):
    """Same math with the kernel's bf16 roundings (x, W, q, k, p, v)."""
    H = wq.shape[1]
    w, b, Hp = _pack_qkv_padded(wq, bq, wk, bk, wv, bv, head_size)
    bf = lambda a: a.astype(jnp.bfloat16).astype(jnp.float32)
    qkv = jnp.einsum("btd,dh->bth", bf(x), bf(w)) + b[0]
    q, k, v = qkv[..., :Hp], qkv[..., Hp:2 * Hp], qkv[..., 2 * Hp:]
    wei = jax.nn.softmax(jnp.einsum("btd,bsd->bts", bf(q), bf(k)), axis=-1)
    out = jnp.einsum("bts,bsd->btd", bf(wei), bf(v))
    return out[..., :H]


if __name__ == "__main__":
    # Small shapes consistent with the module:
    #   d_emb = 32 (flattened patch dim), head_size = 16, seq T = 8, batch B = 2
    B, T, D, H = 2, 8, 32, 16
    key = jax.random.PRNGKey(0)
    kx, kq, kk, kv, kbq, kbk, kbv = jax.random.split(key, 7)

    x = jax.random.normal(kx, (B, T, D), dtype=jnp.float32)
    wq = jax.random.normal(kq, (D, H), dtype=jnp.float32) * 0.05
    wk = jax.random.normal(kk, (D, H), dtype=jnp.float32) * 0.05
    wv = jax.random.normal(kv, (D, H), dtype=jnp.float32) * 0.05
    bq = jax.random.normal(kbq, (H,), dtype=jnp.float32) * 0.05
    bk = jax.random.normal(kbk, (H,), dtype=jnp.float32) * 0.05
    bv = jax.random.normal(kbv, (H,), dtype=jnp.float32) * 0.05

    ref_m = _reference_matched(x, wq, bq, wk, bk, wv, bv, head_size=H)
    ref_f = _reference_f32(x, wq, bq, wk, bk, wv, bv, head_size=H)

    # Default path: single fused grid step (right call at this size on any gen).
    out = head_forward(x, wq, bq, wk, bk, wv, bv, head_size=H)
    out = jax.block_until_ready(out)
    assert out.shape == (B, T, H)
    # tight check vs. precision-matched reference (bf16 operands, approx recip)
    assert jnp.allclose(out, ref_m, atol=1e-2, rtol=1e-2), "mismatch vs matched ref"
    # loose check vs. pure-f32 PyTorch-semantics reference
    assert jnp.allclose(out, ref_f, atol=3e-2, rtol=3e-2), "mismatch vs f32 ref"

    # Also exercise the multi-step grid path (explicit per-sample blocking).
    out2 = head_forward(x, wq, bq, wk, bk, wv, bv, head_size=H, batch_block=1)
    out2 = jax.block_until_ready(out2)
    assert jnp.allclose(out2, ref_m, atol=1e-2, rtol=1e-2), "mismatch (blocked batch)"

    print("KERNEL_OK")
</pallas_src>

<mosaic_0001>
module attributes {stable_mosaic.version = 11 : i64} {
  func.func @_head_kernel(%arg0: i32, %arg1: memref<1x16x32xbf16, #tpu.memory_space<vmem>>, %arg2: memref<32x384xbf16, #tpu.memory_space<vmem>>, %arg3: memref<1x384xf32, #tpu.memory_space<vmem>>, %arg4: memref<2x8x128xf32, #tpu.memory_space<vmem>>) attributes {dimension_semantics = [#tpu.dimension_semantics<parallel>], iteration_bounds = array<i64: 1>, scalar_prefetch = 0 : i64, scratch_operands = 0 : i64, tpu.core_type = #tpu.core_type<tc>, window_params = [{transform_indices = @transform_0, window_bounds = array<i64: 1, 16, 32>}, {pipeline_mode = #tpu.pipeline_mode<synchronous>, transform_indices = @transform_1, window_bounds = array<i64: 32, 384>}, {pipeline_mode = #tpu.pipeline_mode<synchronous>, transform_indices = @transform_2, window_bounds = array<i64: 1, 384>}, {transform_indices = @transform_3, window_bounds = array<i64: 2, 8, 128>}]} {
    %c0 = arith.constant 0 : index
    %c0_0 = arith.constant 0 : index
    %c0_1 = arith.constant 0 : index
    %0 = vector.load %arg1[%c0, %c0_0, %c0_1] : memref<1x16x32xbf16, #tpu.memory_space<vmem>>, vector<1x16x32xbf16>
    %1 = vector.shape_cast %0 : vector<1x16x32xbf16> to vector<16x32xbf16>
    %c0_2 = arith.constant 0 : index
    %c0_3 = arith.constant 0 : index
    %2 = vector.load %arg2[%c0_2, %c0_3] : memref<32x384xbf16, #tpu.memory_space<vmem>>, vector<32x384xbf16>
    %cst = arith.constant dense<0.000000e+00> : vector<16x384xf32>
    %3 = tpu.matmul %1, %2, %cst {dimension_numbers = #tpu.dot_dimension_numbers<[1], [0], [0], [1], [0, 0, 1, 1], [], []>} : vector<16x32xbf16>, vector<32x384xbf16>, vector<16x384xf32> -> vector<16x384xf32>
    %c0_4 = arith.constant 0 : index
    %c0_5 = arith.constant 0 : index
    %4 = vector.load %arg3[%c0_4, %c0_5] : memref<1x384xf32, #tpu.memory_space<vmem>>, vector<1x384xf32>
    %5 = vector.broadcast %4 : vector<1x384xf32> to vector<16x384xf32>
    %6 = arith.addf %3, %5 : vector<16x384xf32>
    %7 = vector.shape_cast %6 : vector<16x384xf32> to vector<2x8x384xf32>
    %8 = vector.extract_strided_slice %7 {offsets = [0, 0, 0], sizes = [2, 8, 128], strides = [1, 1, 1]} : vector<2x8x384xf32> to vector<2x8x128xf32>
    %9 = arith.truncf %8 : vector<2x8x128xf32> to vector<2x8x128xbf16>
    %10 = vector.extract_strided_slice %7 {offsets = [0, 0, 128], sizes = [2, 8, 128], strides = [1, 1, 1]} : vector<2x8x384xf32> to vector<2x8x128xf32>
    %11 = arith.truncf %10 : vector<2x8x128xf32> to vector<2x8x128xbf16>
    %12 = vector.extract_strided_slice %7 {offsets = [0, 0, 256], sizes = [2, 8, 128], strides = [1, 1, 1]} : vector<2x8x384xf32> to vector<2x8x128xf32>
    %13 = arith.truncf %12 : vector<2x8x128xf32> to vector<2x8x128xbf16>
    %cst_6 = arith.constant dense<0.000000e+00> : vector<2x8x8xf32>
    %14 = tpu.matmul %9, %11, %cst_6 {dimension_numbers = #tpu.dot_dimension_numbers<[2], [2], [1], [1], [0, 0, 0, 1, 1, 1], [0], [0]>} : vector<2x8x128xbf16>, vector<2x8x128xbf16>, vector<2x8x8xf32> -> vector<2x8x8xf32>
    %cst_7 = arith.constant dense<0xFF800000> : vector<2x8xf32>
    %15 = vector.multi_reduction <maximumf>, %14, %cst_7 [2] : vector<2x8x8xf32> to vector<2x8xf32>
    %16 = vector.shape_cast %15 : vector<2x8xf32> to vector<2x8x1xf32>
    %17 = vector.broadcast %16 : vector<2x8x1xf32> to vector<2x8x8xf32>
    %18 = arith.subf %14, %17 : vector<2x8x8xf32>
    %19 = math.exp %18 : vector<2x8x8xf32>
    %cst_8 = arith.constant dense<0.000000e+00> : vector<2x8xf32>
    %20 = vector.multi_reduction <add>, %19, %cst_8 [2] : vector<2x8x8xf32> to vector<2x8xf32>
    %21 = vector.shape_cast %20 : vector<2x8xf32> to vector<2x8x1xf32>
    %22 = tpu.reciprocal %21 {approx = true} : vector<2x8x1xf32> -> vector<2x8x1xf32>
    %23 = vector.broadcast %22 : vector<2x8x1xf32> to vector<2x8x8xf32>
    %24 = arith.mulf %19, %23 : vector<2x8x8xf32>
    %25 = arith.truncf %24 : vector<2x8x8xf32> to vector<2x8x8xbf16>
    %cst_9 = arith.constant dense<0.000000e+00> : vector<2x8x128xf32>
    %26 = tpu.matmul %25, %13, %cst_9 {dimension_numbers = #tpu.dot_dimension_numbers<[2], [1], [1], [2], [0, 0, 0, 1, 1, 2], [0], [0]>} : vector<2x8x8xbf16>, vector<2x8x128xbf16>, vector<2x8x128xf32> -> vector<2x8x128xf32>
    %c0_10 = arith.constant 0 : index
    %c0_11 = arith.constant 0 : index
    %c0_12 = arith.constant 0 : index
    %27 = vector.load %arg4[%c0_10, %c0_11, %c0_12] : memref<2x8x128xf32, #tpu.memory_space<vmem>>, vector<2x8x128xf32>
    tpu.vector_store %arg4[%c0_10, %c0_11, %c0_12], %26 {strides = array<i32>} : memref<2x8x128xf32, #tpu.memory_space<vmem>>, vector<2x8x128xf32>,
    return
  }
  func.func @transform_0(%arg0: i32) -> (i32, i32, i32) {
    %c0_i32 = arith.constant 0 : i32
    %c0_i32_0 = arith.constant 0 : i32
    %c0_i32_1 = arith.constant 0 : i32
    return %arg0, %c0_i32, %c0_i32_0 : i32, i32, i32
  }
  func.func @transform_1(%arg0: i32) -> (i32, i32) {
    %c0_i32 = arith.constant 0 : i32
    %c0_i32_0 = arith.constant 0 : i32
    %c0_i32_1 = arith.constant 0 : i32
    return %c0_i32, %c0_i32_0 : i32, i32
  }
  func.func @transform_2(%arg0: i32) -> (i32, i32) {
    %c0_i32 = arith.constant 0 : i32
    %c0_i32_0 = arith.constant 0 : i32
    %c0_i32_1 = arith.constant 0 : i32
    return %c0_i32, %c0_i32_0 : i32, i32
  }
  func.func @transform_3(%arg0: i32) -> (i32, i32, i32) {
    %c0_i32 = arith.constant 0 : i32
    %c0_i32_0 = arith.constant 0 : i32
    %c0_i32_1 = arith.constant 0 : i32
    return %arg0, %c0_i32, %c0_i32_0 : i32, i32, i32
  }
}

</mosaic_0001>

<llo_original>
// kernel: tpu_custom_call.1
$region0: #{tpu_custom_call.1}
  #allocation0 [shape = 'u32[]', space=smem, size = 0x4, offset = 0x4, fixed_abs, tag = 'smem constant byte address 0x4 - core index']
  #allocation1 [shape = 'u32[144,128]{1,0:T(1,128)}', space=vmem, size = 0x12000, scoped, tag = 'internal scratch']
  %s0 = inlined_call_operand.hbm [shape: bf16[1,16,32], index: 0, kind: input, shape index: {}]
  %s1 = inlined_call_operand.hbm [shape: bf16[32,384], index: 1, kind: input, shape index: {}]
  %s2 = inlined_call_operand.vmem [shape: f32[1,384], index: 2, kind: input, shape index: {}]
  %s3 = inlined_call_operand.hbm [shape: f32[2,8,128], index: 3, kind: output, shape index: {}]
  %s4 = sld [smem:[#allocation0]]
  $region30: #{tpu_custom_call.1} parent=0
    _
  %s6 = ssub.s32 1, %s4
  %s7 = scalar_select 0, %s6, %s4
  $region1: #{tpu_custom_call.1} parent=0
    #allocation2 [shape = 'u8[4096]{0}', space=vmem, size = 0x1000, scoped, tag = 'input window, operand 0, single buffered']
    #allocation3 [shape = 's32[1]{0}', space=sflag, size = 0x4, scoped, tag = 'scoped memory for tpu_custom_call.1']
    #allocation4 [shape = 's32[1]{0}', space=sflag, size = 0x4, scoped, tag = 'scoped memory for tpu_custom_call.1']
    #allocation5 [shape = 'u8[24576]{0}', space=vmem, size = 0x6000, scoped, tag = 'input window, operand 1, single buffered']
    #allocation6 [shape = 's32[1]{0}', space=sflag, size = 0x4, scoped, tag = 'scoped memory for tpu_custom_call.1']
    #allocation7 [shape = 'u8[8192]{0}', space=vmem, size = 0x2000, scoped, tag = 'output window, operand 0, single buffered']
    %8 = vsyncpa [#allocation3], 0
    %9 = vsyncpa [#allocation6], 0
    %10 = vsyncpa [#allocation4], 0
    // Predicated region
    $region2: #{tpu_custom_call.1} parent=1 // pred_check
      _
    $region3: #{tpu_custom_call.1} parent=1 // pred_check_branch
      %12 = sbr.rel (0) target = $region5
    $region4: #{tpu_custom_call.1} parent=1 // pred_region
      %s14 = ssub.s32 128, 128
      %15 = vsyncadd [#allocation3], %s14
      %s16 = sshll.u32 [#allocation2], 4
      %s17 = int_to_ptr.vmem [resolvable:$true] %s16
      %22 = dma.hbm_to_vmem [thread:$0]  %s0, 128, %s17, [#allocation3], 64, 64, 4
    $region5: #{tpu_custom_call.1} parent=1 // pred_fallthru
      _
    // Predicated region
    $region6: #{tpu_custom_call.1} parent=1 // pred_check
      _
    $region7: #{tpu_custom_call.1} parent=1 // pred_check_branch
      %24 = sbr.rel (0) target = $region9
    $region8: #{tpu_custom_call.1} parent=1 // pred_region
      %s26 = ssub.s32 768, 768
      %27 = vsyncadd [#allocation6], %s26
      %s28 = sshll.u32 [#allocation5], 4
      %s29 = int_to_ptr.vmem [resolvable:$true] %s28
      %34 = dma.hbm_to_vmem [thread:$0]  %s1, 768, %s29, [#allocation6], 192, 192, 12
    $region9: #{tpu_custom_call.1} parent=1 // pred_fallthru
      _
    // Predicated region
    $region10: #{tpu_custom_call.1} parent=1 // pred_check
      _
    $region11: #{tpu_custom_call.1} parent=1 // pred_check_branch
      %36 = sbr.rel (0) target = $region13
    $region12: #{tpu_custom_call.1} parent=1 // pred_region
      _
    $region13: #{tpu_custom_call.1} parent=1 // pred_fallthru
      _
    // Predicated region
    $region14: #{tpu_custom_call.1} parent=1 // pred_check
      _
    $region15: #{tpu_custom_call.1} parent=1 // pred_check_branch
      %38 = sbr.rel (0) target = $region17
    $region16: #{tpu_custom_call.1} parent=1 // pred_region
      %39 = dma.done [#allocation3], 128
    $region17: #{tpu_custom_call.1} parent=1 // pred_fallthru
      _
    // Predicated region
    $region18: #{tpu_custom_call.1} parent=1 // pred_check
      _
    $region19: #{tpu_custom_call.1} parent=1 // pred_check_branch
      %41 = sbr.rel (0) target = $region21
    $region20: #{tpu_custom_call.1} parent=1 // pred_region
      %42 = dma.done [#allocation6], 768
    $region21: #{tpu_custom_call.1} parent=1 // pred_fallthru
      _
    %v44 = vld [vmem:[#allocation2] sm:$0xf]
    %v45 = vld [vmem:[#allocation2 + $0x4] sm:$0xf]
    %v46 = vld [vmem:[#allocation5] sm:$0xff]
    %v47 = vld [vmem:[#allocation5 + $0x8] sm:$0xf]
    %v48 = vld [vmem:[#allocation5 + $0xc] sm:$0xff]
    %v49 = vld [vmem:[#allocation5 + $0x14] sm:$0xf]
    %v50 = vld [vmem:[#allocation5 + $0x18] sm:$0xff]
    %v51 = vld [vmem:[#allocation5 + $0x20] sm:$0xf]
    %v52 = vld [vmem:[#allocation5 + $0x24] sm:$0xff]
    %v53 = vld [vmem:[#allocation5 + $0x2c] sm:$0xf]
    %v54 = vld [vmem:[%s2] sm:$0x7]
    %v56 = vlaneseq
    %v57 = vshrl.u32 %v56, 7
    %v58 = vsub.s32 0, %v57
    %v59 = vrot.slane %v54, %v58
    %v60 = vlaneseq
    %v61 = vshrl.u32 %v60, 7
    %v62 = vsub.s32 1, %v61
    %v63 = vrot.slane %v54, %v62
    %v64 = vlaneseq
    %v65 = vshrl.u32 %v64, 7
    %v66 = vsub.s32 2, %v65
    %v67 = vrot.slane %v54, %v66
    %v73 = vunpack.c.l.b16 %v44
    %v74 = vunpack.c.l.b16 %v45
    %v75 = vpack.c.b16 %v74, %v73
    %v84 = vunpack.c.l.b16 %v46
    %v85 = vunpack.c.h.b16 %v46
    %v86 = vunpack.c.l.b16 %v47
    %v87 = vunpack.c.l.b16 %v48
    %v88 = vunpack.c.h.b16 %v48
    %v89 = vunpack.c.l.b16 %v49
    %v90 = vunpack.c.l.b16 %v50
    %v91 = vunpack.c.h.b16 %v50
    %v92 = vunpack.c.l.b16 %v51
    %v93 = vunpack.c.l.b16 %v52
    %v94 = vunpack.c.h.b16 %v52
    %v95 = vunpack.c.l.b16 %v53
    %v96 = vpack.c.b16 %v87, %v84
    %v97 = vpack.c.b16 %v88, %v85
    %v98 = vpack.c.b16 %v89, %v86
    %v99 = vpack.c.b16 %v93, %v90
    %v100 = vpack.c.b16 %v94, %v91
    %v101 = vpack.c.b16 %v95, %v92
    %vm108 = vcmask 261120
    %v110 = vsel %vm108, %v75, 0
    %112 = vmatprep.subr.bf16.mxu0 0
    %113 = vmatpush1.bf16.msra.mxu0 0
    %114 = vmatprep.subr.bf16.mxu0 0
    %115 = vmatpush1.bf16.msra.mxu0 0
    %116 = vmatprep.subr.bf16.mxu0 0
    %117 = vmatpush1.bf16.msra.mxu0 0
    %118 = vmatprep.subr.bf16.mxu0 0
    %119 = vmatpush1.bf16.msra.mxu0 0
    %120 = vmatprep.subr.bf16.mxu0 0
    %121 = vmatpush1.bf16.msra.mxu0 0
    %122 = vmatprep.subr.bf16.mxu0 0
    %123 = vmatpush1.bf16.msra.mxu0 0
    %124 = vmatprep.subr.bf16.mxu0 %v100
    %125 = vmatpush1.bf16.msra.mxu0 %v99
    %126 = vmatprep.subr.bf16.mxu0 %v97
    %127 = vmatpush1.bf16.msra.mxu0 %v96
    %128 = vmatprep.subr.bf16.mxu0 0
    %129 = vmatpush2.bf16.msra.mxu0 0
    %130 = vmatprep.subr.bf16.mxu0 0
    %131 = vmatpush2.bf16.msra.mxu0 0
    %132 = vmatprep.subr.bf16.mxu0 0
    %133 = vmatpush2.bf16.msra.mxu0 0
    %134 = vmatprep.subr.bf16.mxu0 0
    %135 = vmatpush2.bf16.msra.mxu0 0
    %136 = vmatprep.subr.bf16.mxu0 0
    %137 = vmatpush2.bf16.msra.mxu0 0
    %138 = vmatprep.subr.bf16.mxu0 0
    %139 = vmatpush2.bf16.msra.mxu0 0
    %140 = vmatprep.subr.bf16.mxu0 0
    %141 = vmatpush2.bf16.msra.mxu0 0
    %142 = vmatprep.subr.bf16.mxu0 0
    %143 = vmatpush2.bf16.msra.mxu0 0
    %144 = vmatprep.mubr.bf16.mxu0 0
    %145 = vmatmul.mubr.bf16.gmra.mxu0 %v110
    %v146 = vpop.f32.mrf.mxu0
    %v147 = vadd.f32 %v59, %v146
    %v148 = vpop.f32.mrf.mxu0
    %v149 = vadd.f32 %v63, %v148
    %v150 = vpop.f32.mrf.mxu0
    %v151 = vadd.f32 %v59, %v150
    %v152 = vpop.f32.mrf.mxu0
    %v153 = vadd.f32 %v63, %v152
    %154 = vdwg.mxu0
    %155 = vmatprep.subr.bf16.mxu0 0
    %156 = vmatpush1.bf16.msra.mxu0 0
    %157 = vmatprep.subr.bf16.mxu0 0
    %158 = vmatpush1.bf16.msra.mxu0 0
    %159 = vmatprep.subr.bf16.mxu0 0
    %160 = vmatpush1.bf16.msra.mxu0 0
    %161 = vmatprep.subr.bf16.mxu0 0
    %162 = vmatpush1.bf16.msra.mxu0 0
    %163 = vmatprep.subr.bf16.mxu0 0
    %164 = vmatpush1.bf16.msra.mxu0 0
    %165 = vmatprep.subr.bf16.mxu0 0
    %166 = vmatpush1.bf16.msra.mxu0 0
    %167 = vmatprep.subr.bf16.mxu0 0
    %168 = vmatpush1.bf16.msra.mxu0 %v101
    %169 = vmatprep.subr.bf16.mxu0 0
    %170 = vmatpush1.bf16.msra.mxu0 %v98
    %171 = vmatprep.subr.bf16.mxu0 0
    %172 = vmatpush2.bf16.msra.mxu0 0
    %173 = vmatprep.subr.bf16.mxu0 0
    %174 = vmatpush2.bf16.msra.mxu0 0
    %175 = vmatprep.subr.bf16.mxu0 0
    %176 = vmatpush2.bf16.msra.mxu0 0
    %177 = vmatprep.subr.bf16.mxu0 0
    %178 = vmatpush2.bf16.msra.mxu0 0
    %179 = vmatprep.subr.bf16.mxu0 0
    %180 = vmatpush2.bf16.msra.mxu0 0
    %181 = vmatprep.subr.bf16.mxu0 0
    %182 = vmatpush2.bf16.msra.mxu0 0
    %183 = vmatprep.subr.bf16.mxu0 0
    %184 = vmatpush2.bf16.msra.mxu0 0
    %185 = vmatprep.subr.bf16.mxu0 0
    %186 = vmatpush2.bf16.msra.mxu0 0
    %187 = vmatprep.mubr.bf16.mxu0 0
    %188 = vmatmul.mubr.bf16.gmra.mxu0 %v110
    %v189 = vpop.f32.mrf.mxu0
    %v190 = vadd.f32 %v67, %v189
    %v191 = vpop.f32.mrf.mxu0
    %v192 = vpop.f32.mrf.mxu0
    %v193 = vadd.f32 %v67, %v192
    %v194 = vpop.f32.mrf.mxu0
    %195 = vdwg.mxu0
    %v196 = vpack.c.bf16 %v147, %v147
    %v197 = vpack.c.bf16 %v151, %v151
    %v198 = vpack.c.bf16 %v149, %v149
    %v199 = vpack.c.bf16 %v153, %v153
    %v200 = vpack.c.bf16 %v190, %v190
    %v201 = vpack.c.bf16 %v193, %v193
    %202 = vmatprep.subr.bf16.mxu0 0
    %203 = vmatpush1.bf16.xpose.msra.mxu0 0
    %204 = vmatprep.subr.bf16.mxu0 0
    %205 = vmatpush1.bf16.xpose.msra.mxu0 0
    %206 = vmatprep.subr.bf16.mxu0 0
    %207 = vmatpush1.bf16.xpose.msra.mxu0 0
    %208 = vmatprep.subr.bf16.mxu0 0
    %209 = vmatpush1.bf16.xpose.msra.mxu0 0
    %210 = vmatprep.subr.bf16.mxu0 0
    %211 = vmatpush1.bf16.xpose.msra.mxu0 0
    %212 = vmatprep.subr.bf16.mxu0 0
    %213 = vmatpush1.bf16.xpose.msra.mxu0 0
    %214 = vmatprep.subr.bf16.mxu0 0
    %215 = vmatpush1.bf16.xpose.msra.mxu0 0
    %216 = vmatprep.subr.bf16.mxu0 0
    %217 = vmatpush1.bf16.xpose.msra.mxu0 %v198
    %218 = vmatprep.subr.bf16.mxu0 0
    %219 = vmatpush2.bf16.xpose.msra.mxu0 0
    %220 = vmatprep.subr.bf16.mxu0 0
    %221 = vmatpush2.bf16.xpose.msra.mxu0 0
    %222 = vmatprep.subr.bf16.mxu0 0
    %223 = vmatpush2.bf16.xpose.msra.mxu0 0
    %224 = vmatprep.subr.bf16.mxu0 0
    %225 = vmatpush2.bf16.xpose.msra.mxu0 0
    %226 = vmatprep.subr.bf16.mxu0 0
    %227 = vmatpush2.bf16.xpose.msra.mxu0 0
    %228 = vmatprep.subr.bf16.mxu0 0
    %229 = vmatpush2.bf16.xpose.msra.mxu0 0
    %230 = vmatprep.subr.bf16.mxu0 0
    %231 = vmatpush2.bf16.xpose.msra.mxu0 0
    %232 = vmatprep.subr.bf16.mxu0 0
    %233 = vmatpush2.bf16.xpose.msra.mxu0 0
    %234 = vmatprep.mubr.bf16.mxu0 0
    %235 = vmatmul.mubr.bf16.gmra.mxu0 %v196
    %v236 = vpop.f32.mrf.mxu0
    %v237 = vadd.f32 0.0, %v236
    %v238 = vpop.f32.mrf.mxu0
    %v239 = vpop.f32.mrf.mxu0
    %v240 = vpop.f32.mrf.mxu0
    %241 = vdwg.mxu0
    %242 = vmatprep.subr.bf16.mxu0 0
    %243 = vmatpush1.bf16.xpose.msra.mxu0 0
    %244 = vmatprep.subr.bf16.mxu0 0
    %245 = vmatpush1.bf16.xpose.msra.mxu0 0
    %246 = vmatprep.subr.bf16.mxu0 0
    %247 = vmatpush1.bf16.xpose.msra.mxu0 0
    %248 = vmatprep.subr.bf16.mxu0 0
    %249 = vmatpush1.bf16.xpose.msra.mxu0 0
    %250 = vmatprep.subr.bf16.mxu0 0
    %251 = vmatpush1.bf16.xpose.msra.mxu0 0
    %252 = vmatprep.subr.bf16.mxu0 0
    %253 = vmatpush1.bf16.xpose.msra.mxu0 0
    %254 = vmatprep.subr.bf16.mxu0 0
    %255 = vmatpush1.bf16.xpose.msra.mxu0 0
    %256 = vmatprep.subr.bf16.mxu0 0
    %257 = vmatpush1.bf16.xpose.msra.mxu0 %v199
    %258 = vmatprep.subr.bf16.mxu0 0
    %259 = vmatpush2.bf16.xpose.msra.mxu0 0
    %260 = vmatprep.subr.bf16.mxu0 0
    %261 = vmatpush2.bf16.xpose.msra.mxu0 0
    %262 = vmatprep.subr.bf16.mxu0 0
    %263 = vmatpush2.bf16.xpose.msra.mxu0 0
    %264 = vmatprep.subr.bf16.mxu0 0
    %265 = vmatpush2.bf16.xpose.msra.mxu0 0
    %266 = vmatprep.subr.bf16.mxu0 0
    %267 = vmatpush2.bf16.xpose.msra.mxu0 0
    %268 = vmatprep.subr.bf16.mxu0 0
    %269 = vmatpush2.bf16.xpose.msra.mxu0 0
    %270 = vmatprep.subr.bf16.mxu0 0
    %271 = vmatpush2.bf16.xpose.msra.mxu0 0
    %272 = vmatprep.subr.bf16.mxu0 0
    %273 = vmatpush2.bf16.xpose.msra.mxu0 0
    %274 = vmatprep.mubr.bf16.mxu0 0
    %275 = vmatmul.mubr.bf16.gmra.mxu0 %v197
    %v276 = vpop.f32.mrf.mxu0
    %v277 = vadd.f32 0.0, %v276
    %v278 = vpop.f32.mrf.mxu0
    %v279 = vpop.f32.mrf.mxu0
    %v280 = vpop.f32.mrf.mxu0
    %281 = vdwg.mxu0
    %vm282 = vcmask 64512
    %v283 = vsel %vm282, %v237, -inf
    %284 = vmax.xlane.f32.xlu0 %v283
    %v285 = vpop.xlane.xlu0 %284
    %v286 = vsel %vm282, %v277, -inf
    %287 = vmax.xlane.f32.xlu0 %v286
    %v288 = vpop.xlane.xlu0 %287
    %v289 = vsub.f32 %v237, %v285
    %v290 = vsub.f32 %v277, %v288
    %v291 = vmul.f32 %v289, 1.442695
    %v292 = vpow.pop %v291
    %v293 = vmul.f32 %v290, 1.442695
    %v294 = vpow.pop %v293
    %v295 = vsel %vm282, %v292, 0.0
    %296 = vadd.xlane.f32.xlu0 %v295
    %v297 = vpop.xlane.xlu0 %296
    %v298 = vsel %vm282, %v294, 0.0
    %299 = vadd.xlane.f32.xlu0 %v298
    %v300 = vpop.xlane.xlu0 %299
    %v301 = vrcp.pop %v297
    %v302 = vrcp.pop %v300
    %v303 = vmul.f32 %v292, %v301
    %v304 = vmul.f32 %v294, %v302
    %v305 = vpack.c.bf16 %v303, %v303
    %v306 = vpack.c.bf16 %v304, %v304
    %v308 = vsel %vm282, %v305, 0
    %vm310 = vcmask 1043456
    %v312 = vsel %vm310, %v200, 0
    %314 = vmatprep.subr.bf16.mxu0 0
    %315 = vmatpush1.bf16.msra.mxu0 0
    %316 = vmatprep.subr.bf16.mxu0 0
    %317 = vmatpush1.bf16.msra.mxu0 0
    %318 = vmatprep.subr.bf16.mxu0 0
    %319 = vmatpush1.bf16.msra.mxu0 0
    %320 = vmatprep.subr.bf16.mxu0 0
    %321 = vmatpush1.bf16.msra.mxu0 0
    %322 = vmatprep.subr.bf16.mxu0 0
    %323 = vmatpush1.bf16.msra.mxu0 0
    %324 = vmatprep.subr.bf16.mxu0 0
    %325 = vmatpush1.bf16.msra.mxu0 0
    %326 = vmatprep.subr.bf16.mxu0 0
    %327 = vmatpush1.bf16.msra.mxu0 0
    %328 = vmatprep.subr.bf16.mxu0 0
    %329 = vmatpush1.bf16.msra.mxu0 %v312
    %330 = vmatprep.subr.bf16.mxu0 0
    %331 = vmatpush2.bf16.msra.mxu0 0
    %332 = vmatprep.subr.bf16.mxu0 0
    %333 = vmatpush2.bf16.msra.mxu0 0
    %334 = vmatprep.subr.bf16.mxu0 0
    %335 = vmatpush2.bf16.msra.mxu0 0
    %336 = vmatprep.subr.bf16.mxu0 0
    %337 = vmatpush2.bf16.msra.mxu0 0
    %338 = vmatprep.subr.bf16.mxu0 0
    %339 = vmatpush2.bf16.msra.mxu0 0
    %340 = vmatprep.subr.bf16.mxu0 0
    %341 = vmatpush2.bf16.msra.mxu0 0
    %342 = vmatprep.subr.bf16.mxu0 0
    %343 = vmatpush2.bf16.msra.mxu0 0
    %344 = vmatprep.subr.bf16.mxu0 0
    %345 = vmatpush2.bf16.msra.mxu0 0
    %346 = vmatprep.mubr.bf16.mxu0 0
    %347 = vmatmul.mubr.bf16.gmra.mxu0 %v308
    %v348 = vpop.f32.mrf.mxu0
    %v349 = vadd.f32 0.0, %v348
    %v350 = vpop.f32.mrf.mxu0
    %v351 = vpop.f32.mrf.mxu0
    %v352 = vpop.f32.mrf.mxu0
    %353 = vdwg.mxu0
    %v355 = vsel %vm282, %v306, 0
    %v358 = vsel %vm310, %v201, 0
    %360 = vmatprep.subr.bf16.mxu0 0
    %361 = vmatpush1.bf16.msra.mxu0 0
    %362 = vmatprep.subr.bf16.mxu0 0
    %363 = vmatpush1.bf16.msra.mxu0 0
    %364 = vmatprep.subr.bf16.mxu0 0
    %365 = vmatpush1.bf16.msra.mxu0 0
    %366 = vmatprep.subr.bf16.mxu0 0
    %367 = vmatpush1.bf16.msra.mxu0 0
    %368 = vmatprep.subr.bf16.mxu0 0
    %369 = vmatpush1.bf16.msra.mxu0 0
    %370 = vmatprep.subr.bf16.mxu0 0
    %371 = vmatpush1.bf16.msra.mxu0 0
    %372 = vmatprep.subr.bf16.mxu0 0
    %373 = vmatpush1.bf16.msra.mxu0 0
    %374 = vmatprep.subr.bf16.mxu0 0
    %375 = vmatpush1.bf16.msra.mxu0 %v358
    %376 = vmatprep.subr.bf16.mxu0 0
    %377 = vmatpush2.bf16.msra.mxu0 0
    %378 = vmatprep.subr.bf16.mxu0 0
    %379 = vmatpush2.bf16.msra.mxu0 0
    %380 = vmatprep.subr.bf16.mxu0 0
    %381 = vmatpush2.bf16.msra.mxu0 0
    %382 = vmatprep.subr.bf16.mxu0 0
    %383 = vmatpush2.bf16.msra.mxu0 0
    %384 = vmatprep.subr.bf16.mxu0 0
    %385 = vmatpush2.bf16.msra.mxu0 0
    %386 = vmatprep.subr.bf16.mxu0 0
    %387 = vmatpush2.bf16.msra.mxu0 0
    %388 = vmatprep.subr.bf16.mxu0 0
    %389 = vmatpush2.bf16.msra.mxu0 0
    %390 = vmatprep.subr.bf16.mxu0 0
    %391 = vmatpush2.bf16.msra.mxu0 0
    %392 = vmatprep.mubr.bf16.mxu0 0
    %393 = vmatmul.mubr.bf16.gmra.mxu0 %v355
    %v394 = vpop.f32.mrf.mxu0
    %v395 = vadd.f32 0.0, %v394
    %v396 = vpop.f32.mrf.mxu0
    %v397 = vpop.f32.mrf.mxu0
    %v398 = vpop.f32.mrf.mxu0
    %399 = vdwg.mxu0
    %400 = vst [vmem:[#allocation7] sm:$0xff] %v349
    %401 = vst [vmem:[#allocation7 + $0x8] sm:$0xff] %v395
    // Predicated region
    $region22: #{tpu_custom_call.1} parent=1 // pred_check
      _
    $region23: #{tpu_custom_call.1} parent=1 // pred_check_branch
      %403 = sbr.rel (0) target = $region25
    $region24: #{tpu_custom_call.1} parent=1 // pred_region
      %s405 = ssub.s32 256, 256
      %406 = vsyncadd [#allocation4], %s405
      %s407 = sshll.u32 [#allocation7], 4
      %s408 = int_to_ptr.vmem [resolvable:$true] %s407
      %413 = dma.vmem_to_hbm [thread:$0]  %s408, 256, %s3, [#allocation4], 128, 128, 8
    $region25: #{tpu_custom_call.1} parent=1 // pred_fallthru
      _
    // Predicated region
    $region26: #{tpu_custom_call.1} parent=1 // pred_check
      _
    $region27: #{tpu_custom_call.1} parent=1 // pred_check_branch
      %415 = sbr.rel (0) target = $region29
    $region28: #{tpu_custom_call.1} parent=1 // pred_region
      %416 = dma.done [#allocation4], 256
    $region29: #{tpu_custom_call.1} parent=1 // pred_fallthru
      _
    %417 = vsyncpa [#allocation3], 1
    %418 = vsyncpa [#allocation6], 1
    %419 = vsyncpa [#allocation4], 1

</llo_original>
